<compile_context>
chip_gen: v6e
topology: v6e:2x2x1
jax: 0.10.0
libtpu: 0.0.40
codegen_flags: <defaults>
</compile_context>

<pallas_src>
import math
from functools import partial

import jax
import jax.numpy as jnp
from jax.experimental import pallas as pl
from jax.experimental.pallas import tpu as pltpu

EPS = 1e-5  # RMSNorm eps (PyTorch default in the module)


def _rmsnorm(h, w_row, d_model):
    # h: (S, D), w_row: (1, D); rsqrt goes to the EUP slot.
    ms = jnp.sum(h * h, axis=-1, keepdims=True) * (1.0 / d_model)
    return h * jax.lax.rsqrt(ms + EPS) * w_row


# --------------------------- Pallas kernels ---------------------------------

def embed_kernel(ids_ref, emb_ref, o_ref):
    # Row gather: the token id selects the embedding row via the index_map.
    del ids_ref
    o_ref[...] = emb_ref[...]


def stack_kernel(x_ref, wqkv_ref, wo_ref, ln1_ref, ln2_ref,
                 w1_ref, w3_ref, w2_ref, cos_ref, sin_ref, perm_ref,
                 o_ref, *, d_model, n_heads, d_k):
    """One (batch b, layer l) step of the fused TransformerBlock stack."""
    l = pl.program_id(1)

    # Residual stream lives in the revisited output block across the L axis.
    @pl.when(l == 0)
    def _():
        o_ref[...] = x_ref[...]

    x = o_ref[0]                                        # (S, D) f32
    S = x.shape[0]
    bf16 = jnp.bfloat16

    # ---- attention sub-layer ----
    h = _rmsnorm(x, ln1_ref[0], d_model)
    qkv = jnp.dot(h.astype(bf16), wqkv_ref[0],
                  preferred_element_type=jnp.float32)   # (S, 3D)
    q = qkv[:, :d_model]
    k = qkv[:, d_model:2 * d_model]
    v = qkv[:, 2 * d_model:]

    # RoPE applied once to full-width Q/K (cos/sin tiled per head, alternating
    # sign folded into sin; pair swap as a matmul with a D x D permutation).
    cos = cos_ref[...]
    sin = sin_ref[...]
    P = perm_ref[...]
    q = q * cos + jnp.dot(q, P, preferred_element_type=jnp.float32) * sin
    k = k * cos + jnp.dot(k, P, preferred_element_type=jnp.float32) * sin

    # Head-batched attention: two batched einsums instead of 2H tiny matmuls.
    qh = jnp.stack([q[:, hd * d_k:(hd + 1) * d_k] for hd in range(n_heads)], axis=0)
    kh = jnp.stack([k[:, hd * d_k:(hd + 1) * d_k] for hd in range(n_heads)], axis=0)
    vh = jnp.stack([v[:, hd * d_k:(hd + 1) * d_k] for hd in range(n_heads)], axis=0)

    scores = jnp.einsum('hqd,hkd->hqk', qh, kh,
                        preferred_element_type=jnp.float32) * (1.0 / math.sqrt(d_k))
    row = jax.lax.broadcasted_iota(jnp.int32, (S, S), 0)
    col = jax.lax.broadcasted_iota(jnp.int32, (S, S), 1)
    scores = jnp.where((row >= col)[None, :, :], scores, -jnp.inf)
    m = jnp.max(scores, axis=-1, keepdims=True)
    e = jnp.exp(scores - m)
    p = e * pl.reciprocal(jnp.sum(e, axis=-1, keepdims=True), approx=True)
    ctx_h = jnp.einsum('hqk,hkd->hqd', p, vh,
                       preferred_element_type=jnp.float32)      # (H, S, d_k)
    ctx = jnp.concatenate([ctx_h[hd] for hd in range(n_heads)], axis=-1)

    attn = jnp.dot(ctx.astype(bf16), wo_ref[0],
                   preferred_element_type=jnp.float32)
    x1 = attn + x

    # ---- feed-forward sub-layer (SwiGLU) ----
    g = _rmsnorm(x1, ln2_ref[0], d_model).astype(bf16)
    p1 = jnp.dot(g, w1_ref[0], preferred_element_type=jnp.float32)
    p1 = p1 * pl.reciprocal(1.0 + jnp.exp(-p1), approx=True)    # SiLU (f32 VPU/EUP)
    p3 = jnp.dot(g, w3_ref[0], preferred_element_type=jnp.float32)
    ffn = jnp.dot((p1 * p3).astype(bf16), w2_ref[0],
                  preferred_element_type=jnp.float32)
    o_ref[0] = (ffn + x1).astype(o_ref.dtype)


def head_kernel(x_ref, lnf_ref, wout_ref, o_ref, *, d_model):
    h = _rmsnorm(x_ref[0], lnf_ref[...], d_model)
    o_ref[0] = jnp.dot(h.astype(jnp.bfloat16), wout_ref[...],
                       preferred_element_type=jnp.float32)


# --------------------------- JAX glue / wrapper ------------------------------

def rope_tables(theta, d_k, n_heads, seq_len):
    # Per-head tables, tiled across heads so RoPE can be applied to full-D Q/K.
    i = jnp.arange(seq_len, dtype=jnp.float32)
    kk = (jnp.arange(d_k) // 2).astype(jnp.float32)
    thetas = i[:, None] / jnp.power(theta, 2.0 * kk / d_k)      # (S, d_k)
    cos = jnp.cos(thetas)
    sin = jnp.sin(thetas)
    even_signs = jnp.where(jnp.arange(d_k) % 2 == 0, -1.0, 1.0)
    sin = sin * even_signs
    D = d_k * n_heads
    cos_d = jnp.tile(cos, (1, n_heads))                         # (S, D)
    sin_d = jnp.tile(sin, (1, n_heads))                         # (S, D)
    pair_incr = jnp.where(jnp.arange(D) % 2 == 0, 1, -1)
    pair_swaps = jnp.arange(D) + pair_incr                      # local pair swap
    perm = jnp.zeros((D, D), jnp.float32).at[pair_swaps, jnp.arange(D)].set(1.0)
    return cos_d, sin_d, perm


def init_params(key, hp):
    # Deterministic synthetic init (the reference zero-inits attention weights,
    # which would be degenerate, so small random values are used instead).
    V, D, F, L = hp["vocab_size"], hp["d_model"], hp["d_ff"], hp["n_layers"]
    keys = iter(jax.random.split(key, 2 + 7 * L))

    def tn(k, shape, std):
        return std * jax.random.truncated_normal(k, -3.0, 3.0, shape, jnp.float32)

    emb = tn(next(keys), (V, D), 1.0)
    wqkv_l, wo_l, w1_l, w2_l, w3_l = [], [], [], [], []
    for _ in range(L):
        std_dd = math.sqrt(2.0 / (D + D))
        wq = tn(next(keys), (D, D), std_dd)
        wk = tn(next(keys), (D, D), std_dd)
        wv = tn(next(keys), (D, D), std_dd)
        wo = tn(next(keys), (D, D), std_dd)
        w1 = jax.random.normal(next(keys), (F, D), jnp.float32) / math.sqrt(D)
        w2 = jax.random.normal(next(keys), (D, F), jnp.float32) / math.sqrt(F)
        w3 = jax.random.normal(next(keys), (F, D), jnp.float32) / math.sqrt(D)
        wqkv_l.append(jnp.concatenate([wq, wk, wv], axis=0).T)  # (D, 3D)
        wo_l.append(wo.T)
        w1_l.append(w1.T)
        w2_l.append(w2.T)
        w3_l.append(w3.T)
    wout = tn(next(keys), (V, D), math.sqrt(2.0 / (D + V)))

    bf16 = jnp.bfloat16
    return {
        "embeddings": emb,                                  # (V, D) f32
        "wqkv_t": jnp.stack(wqkv_l).astype(bf16),           # (L, D, 3D)
        "wo_t":   jnp.stack(wo_l).astype(bf16),             # (L, D, D)
        "w1_t":   jnp.stack(w1_l).astype(bf16),             # (L, D, F)
        "w2_t":   jnp.stack(w2_l).astype(bf16),             # (L, F, D)
        "w3_t":   jnp.stack(w3_l).astype(bf16),             # (L, D, F)
        "ln1": jnp.ones((L, 1, D), jnp.float32),
        "ln2": jnp.ones((L, 1, D), jnp.float32),
        "ln_final": jnp.ones((1, D), jnp.float32),
        "wout_t": wout.T.astype(bf16),                      # (D, V)
    }


def run_transformer_lm(tokens, params, hp):
    B, S = tokens.shape
    D, V, F = hp["d_model"], hp["vocab_size"], hp["d_ff"]
    L, H = hp["n_layers"], hp["n_heads"]
    d_k = D // H
    # TODO(synk): the reference mask buffer is tril(ones(d_k, d_k))[:S, :S], so
    # only S <= d_k is supported; surfaced here rather than silently wrong.
    assert S <= d_k, "reference TransformerBlock only supports seq_len <= d_k"

    cos, sin, perm = params["rope"]

    # ---- 1) embedding: scalar-prefetch row gather (no one-hot matmul) ----
    tok_flat = tokens.reshape(B * S).astype(jnp.int32)
    emb3 = params["embeddings"].reshape(V, 1, D)
    x = pl.pallas_call(
        embed_kernel,
        out_shape=jax.ShapeDtypeStruct((B * S, 1, D), jnp.float32),
        grid_spec=pltpu.PrefetchScalarGridSpec(
            num_scalar_prefetch=1,
            grid=(B * S,),
            in_specs=[pl.BlockSpec((1, 1, D), lambda i, ids: (ids[i], 0, 0))],
            out_specs=pl.BlockSpec((1, 1, D), lambda i, ids: (i, 0, 0)),
        ),
        compiler_params=pltpu.CompilerParams(dimension_semantics=("arbitrary",)),
    )(tok_flat, emb3).reshape(B, S, D)

    # ---- 2) fused stack of L TransformerBlocks: grid = (B parallel, L arbitrary) ----
    x = pl.pallas_call(
        partial(stack_kernel, d_model=D, n_heads=H, d_k=d_k),
        out_shape=jax.ShapeDtypeStruct((B, S, D), jnp.float32),
        grid=(B, L),
        in_specs=[
            pl.BlockSpec((1, S, D), lambda b, l: (b, 0, 0)),       # x (used at l==0)
            pl.BlockSpec((1, D, 3 * D), lambda b, l: (l, 0, 0)),   # wqkv (bf16)
            pl.BlockSpec((1, D, D), lambda b, l: (l, 0, 0)),       # wo   (bf16)
            pl.BlockSpec((1, 1, D), lambda b, l: (l, 0, 0)),       # ln1
            pl.BlockSpec((1, 1, D), lambda b, l: (l, 0, 0)),       # ln2
            pl.BlockSpec((1, D, F), lambda b, l: (l, 0, 0)),       # w1   (bf16)
            pl.BlockSpec((1, D, F), lambda b, l: (l, 0, 0)),       # w3   (bf16)
            pl.BlockSpec((1, F, D), lambda b, l: (l, 0, 0)),       # w2   (bf16)
            pl.BlockSpec((S, D), lambda b, l: (0, 0)),             # cos
            pl.BlockSpec((S, D), lambda b, l: (0, 0)),             # sin
            pl.BlockSpec((D, D), lambda b, l: (0, 0)),             # rope pair-swap perm
        ],
        out_specs=pl.BlockSpec((1, S, D), lambda b, l: (b, 0, 0)),
        compiler_params=pltpu.CompilerParams(
            dimension_semantics=("parallel", "arbitrary")),
    )(x, params["wqkv_t"], params["wo_t"], params["ln1"], params["ln2"],
      params["w1_t"], params["w3_t"], params["w2_t"], cos, sin, perm)

    # ---- 3) final RMSNorm + lm head, tiled over the vocab axis ----
    TV = V if (V <= 512 or V % 512 != 0) else 512
    NV = V // TV
    logits = pl.pallas_call(
        partial(head_kernel, d_model=D),
        out_shape=jax.ShapeDtypeStruct((B, S, V), jnp.float32),
        grid=(B, NV),
        in_specs=[pl.BlockSpec((1, S, D), lambda b, v: (b, 0, 0)),
                  pl.BlockSpec((1, D), lambda b, v: (0, 0)),
                  pl.BlockSpec((D, TV), lambda b, v: (0, v))],
        out_specs=pl.BlockSpec((1, S, TV), lambda b, v: (b, 0, v)),
        compiler_params=pltpu.CompilerParams(
            dimension_semantics=("parallel", "arbitrary")),
    )(x, params["ln_final"], params["wout_t"])
    return logits


# --------------------------- pure-JAX reference ------------------------------

def ref_forward(tokens, params, hp):
    V, D, H, L = hp["vocab_size"], hp["d_model"], hp["n_heads"], hp["n_layers"]
    d_k = D // H
    cos_d, sin_d, perm_d = params["rope"]
    cos, sin, perm = cos_d[:, :d_k], sin_d[:, :d_k], perm_d[:d_k, :d_k]
    f32 = lambda a: a.astype(jnp.float32)

    def rms(h, w):
        r = jnp.sqrt(EPS + jnp.sum(h * h, -1, keepdims=True) / D)
        return h / r * w.reshape(-1)

    x = params["embeddings"][tokens]                       # (B, S, D)
    B, S, _ = x.shape
    for l in range(L):
        h = rms(x, params["ln1"][l])
        qkv = h @ f32(params["wqkv_t"][l])
        q, k, v = jnp.split(qkv, 3, axis=-1)
        sh = lambda t: t.reshape(B, S, H, d_k).transpose(0, 2, 1, 3)
        q, k, v = sh(q), sh(k), sh(v)
        rope = lambda t: t * cos + (t @ perm) * sin
        q, k = rope(q), rope(k)
        scores = jnp.einsum("bhqd,bhkd->bhqk", q, k) / math.sqrt(d_k)
        mask = jnp.tril(jnp.ones((S, S), bool))
        scores = jnp.where(mask, scores, -jnp.inf)
        p = jax.nn.softmax(scores, axis=-1)
        ctx = jnp.einsum("bhqk,bhkd->bhqd", p, v).transpose(0, 2, 1, 3).reshape(B, S, D)
        x1 = ctx @ f32(params["wo_t"][l]) + x
        g = rms(x1, params["ln2"][l])
        p1 = g @ f32(params["w1_t"][l])
        p1 = p1 * jax.nn.sigmoid(p1)
        p3 = g @ f32(params["w3_t"][l])
        x = (p1 * p3) @ f32(params["w2_t"][l]) + x1
    return rms(x, params["ln_final"]) @ f32(params["wout_t"])


if __name__ == "__main__":
    hp = dict(vocab_size=64, context_length=16, d_model=32, d_ff=64,
              n_layers=2, n_heads=2, rope_theta=10000.0)
    B, S = 2, 8
    d_k = hp["d_model"] // hp["n_heads"]

    key = jax.random.PRNGKey(0)
    pkey, tkey = jax.random.split(key)
    params = init_params(pkey, hp)
    params["rope"] = rope_tables(hp["rope_theta"], d_k, hp["n_heads"], S)
    tokens = jax.random.randint(tkey, (B, S), 0, hp["vocab_size"], dtype=jnp.int32)

    logits = run_transformer_lm(tokens, params, hp)
    logits = jax.block_until_ready(logits)

    ref = ref_forward(tokens, params, hp)
    assert logits.shape == (B, S, hp["vocab_size"])
    max_err = float(jnp.max(jnp.abs(logits - ref)))
    assert jnp.allclose(logits, ref, rtol=2e-2, atol=2e-2), max_err
    print("KERNEL_OK")
</pallas_src>

<mosaic_0001>
module attributes {stable_mosaic.version = 11 : i64} {
  func.func @embed_kernel(%arg0: i32, %arg1: memref<16xi32, #tpu.memory_space<smem>>, %arg2: memref<1x1x32xf32, #tpu.memory_space<vmem>>, %arg3: memref<1x1x32xf32, #tpu.memory_space<vmem>>) attributes {dimension_semantics = [#tpu.dimension_semantics<arbitrary>], iteration_bounds = array<i64: 16>, scalar_prefetch = 1 : i64, scratch_operands = 0 : i64, tpu.core_type = #tpu.core_type<tc>, window_params = [{transform_indices = @transform_0, window_bounds = array<i64: 1, 1, 32>}, {transform_indices = @transform_1, window_bounds = array<i64: 1, 1, 32>}]} {
    %c0 = arith.constant 0 : index
    %c0_0 = arith.constant 0 : index
    %c0_1 = arith.constant 0 : index
    %0 = vector.load %arg2[%c0, %c0_0, %c0_1] : memref<1x1x32xf32, #tpu.memory_space<vmem>>, vector<1x1x32xf32>
    %c0_2 = arith.constant 0 : index
    %c0_3 = arith.constant 0 : index
    %c0_4 = arith.constant 0 : index
    %1 = vector.load %arg3[%c0_2, %c0_3, %c0_4] : memref<1x1x32xf32, #tpu.memory_space<vmem>>, vector<1x1x32xf32>
    tpu.vector_store %arg3[%c0_2, %c0_3, %c0_4], %0 {strides = array<i32>} : memref<1x1x32xf32, #tpu.memory_space<vmem>>, vector<1x1x32xf32>,
    return
  }
  func.func @transform_0(%arg0: i32, %arg1: memref<16xi32, #tpu.memory_space<smem>>) -> (i32, i32, i32) {
    %0 = arith.index_cast %arg0 : i32 to index
    %1 = memref.load %arg1[%0] : memref<16xi32, #tpu.memory_space<smem>>
    %c0_i32 = arith.constant 0 : i32
    %c0_i32_0 = arith.constant 0 : i32
    %c0_i32_1 = arith.constant 0 : i32
    return %1, %c0_i32, %c0_i32_0 : i32, i32, i32
  }
  func.func @transform_1(%arg0: i32, %arg1: memref<16xi32, #tpu.memory_space<smem>>) -> (i32, i32, i32) {
    %c0_i32 = arith.constant 0 : i32
    %c0_i32_0 = arith.constant 0 : i32
    %c0_i32_1 = arith.constant 0 : i32
    return %arg0, %c0_i32, %c0_i32_0 : i32, i32, i32
  }
}

</mosaic_0001>

<llo_original>
// kernel: tpu_custom_call.1
$region0: #{tpu_custom_call.1}
  #allocation0 [shape = 'u32[]', space=smem, size = 0x4, offset = 0x4, fixed_abs, tag = 'smem constant byte address 0x4 - core index']
  #allocation1 [shape = 'u32[144,128]{1,0:T(1,128)}', space=vmem, size = 0x12000, scoped, tag = 'internal scratch']
  #allocation2 [shape = 's32[1]{0}', space=sflag, size = 0x4, scoped, tag = 'scoped memory for tpu_custom_call.1']
  #allocation3 [shape = 'u8[512]{0}', space=smem, size = 0x200, scoped, tag = 'prefetched SMEM operand 0']
  %s0 = inlined_call_operand.vmem [shape: s32[16], index: 0, kind: input, shape index: {}]
  %s1 = inlined_call_operand.vmem [shape: f32[64,1,32], index: 1, kind: input, shape index: {}]
  %s2 = inlined_call_operand.hbm [shape: f32[16,1,32], index: 2, kind: output, shape index: {}]
  %s3 = sld [smem:[#allocation0]]
  $region37: #{tpu_custom_call.1} parent=0
    _
  %s5 = ssub.s32 1, %s3
  %s6 = scalar_select 0, %s5, %s3
  %s7 = sshll.u32 %s0, 4
  %s8 = int_to_ptr.vmem [resolvable:$true] %s7
  %10 = dma.vmem_to_smem %s8, 16, [#allocation3], [#allocation2]
  %11 = dma.done [#allocation2], 16
  %12 = sfence
  $region1: #{tpu_custom_call.1} parent=0
    #allocation4 [shape = 'u8[1024]{0}', space=vmem, size = 0x400, scoped, tag = 'output window, operand 0']
    #allocation5 [shape = 's32[2]{0}', space=sflag, size = 0x8, scoped, tag = 'scoped memory for tpu_custom_call.1']
    %13 = vsyncpa [#allocation5], 0
    %s14 = scalar_lea.sflag [#allocation5], 1
    %15 = vsyncpa %s14, 0
    loop: start=0, step=1, limit=18
    $region2: #{tpu_custom_call.1} parent=1 // loop_pre_header
      _
    $region3: #{tpu_custom_call.1} parent=1 // loop_header
      %s17 = sphi 0, %s21
      %p18 = scmp.ge.s32.totalorder %s17, 18
      %s29 = sphi 0, %s31
      %s32 = sphi 0, %s29
      %s33 = sphi 0, %s32
      %s49 = sphi 0, %s33
      %s55 = sphi 0, %s57
      %s58 = sphi 0, %s55
      %s59 = sphi 0, %s58
      %s75 = sphi 0, %s59
    $region4: #{tpu_custom_call.1} parent=1 // loop_header_branch
      %20 = sbr.rel (%p18) target = $region8
    $region5: #{tpu_custom_call.1} parent=1 // loop_body
      %s22 = ssub.s32 %s17, 1
      %s23 = ssub.s32 %s17, 2
      %s24 = sadd.s32 %s17, 1
      %s25 = sld [smem:[#allocation3 + %s17]]
      %s26 = sld [smem:[#allocation3 + %s24]]
      %s27 = ssub.s32 %s25, %s26
      %p28 = scmp.eq.s32.totalorder %s27, 0
      %s30 = sadd.s32 %s29, 1
      %s31 = scalar_select %p28, %s29, %s30
      %p34 = pneg %p28
      %p35 = scmp.eq.s32.totalorder %s17, 15
      %p36 = por %p34, %p35
      %p37 = scmp.ne.s32.totalorder %s29, %s32
      %p38 = scmp.eq.s32.totalorder %s17, 0
      %p39 = por %p37, %p38
      %p40 = scmp.ne.s32.totalorder %s29, %s32
      %p41 = scmp.eq.s32.totalorder %s22, 15
      %p42 = por %p40, %p41
      %p43 = scmp.ne.s32.totalorder %s32, %s33
      %p44 = scmp.eq.s32.totalorder %s22, 0
      %p45 = por %p43, %p44
      %p46 = scmp.ne.s32.totalorder %s32, %s33
      %p47 = scmp.eq.s32.totalorder %s23, 15
      %p48 = por %p46, %p47
      %p50 = scmp.ne.s32.totalorder %s33, %s49
      %p51 = scmp.eq.s32.totalorder %s23, 0
      %p52 = por %p50, %p51
      %s53 = ssub.s32 %s17, %s24
      %p54 = scmp.eq.s32.totalorder %s53, 0
      %s56 = sadd.s32 %s55, 1
      %s57 = scalar_select %p54, %s55, %s56
      %p60 = pneg %p54
      %p61 = scmp.eq.s32.totalorder %s17, 15
      %p62 = por %p60, %p61
      %p63 = scmp.ne.s32.totalorder %s55, %s58
      %p64 = scmp.eq.s32.totalorder %s17, 0
      %p65 = por %p63, %p64
      %p66 = scmp.ne.s32.totalorder %s55, %s58
      %p67 = scmp.eq.s32.totalorder %s22, 15
      %p68 = por %p66, %p67
      %p69 = scmp.ne.s32.totalorder %s58, %s59
      %p70 = scmp.eq.s32.totalorder %s22, 0
      %p71 = por %p69, %p70
      %p72 = scmp.ne.s32.totalorder %s58, %s59
      %p73 = scmp.eq.s32.totalorder %s23, 15
      %p74 = por %p72, %p73
      %p76 = scmp.ne.s32.totalorder %s59, %s75
      %p77 = scmp.eq.s32.totalorder %s23, 0
      %p78 = por %p76, %p77
      %p79 = scmp.le.s32.totalorder 1, %s17
      %p80 = scmp.lt.s32.totalorder %s17, 17
      %p81 = pnand %p79, %p80
      %p82 = pneg %p81
      // Predicated region
      $region9: #{tpu_custom_call.1} parent=5 // pred_check
        _
      $region10: #{tpu_custom_call.1} parent=5 // pred_check_branch
        %84 = sbr.rel (%p81) target = $region12
      $region11: #{tpu_custom_call.1} parent=5 // pred_region
        %s85 = ssub.s32 %s17, 1
      $region12: #{tpu_custom_call.1} parent=5 // pred_fallthru
        _
      %p86 = scmp.lt.s32.totalorder %s17, 16
      // Predicated region
      $region13: #{tpu_custom_call.1} parent=5 // pred_check
        %p87 = pneg %p86
      $region14: #{tpu_custom_call.1} parent=5 // pred_check_branch
        %89 = sbr.rel (%p87) target = $region16
      $region15: #{tpu_custom_call.1} parent=5 // pred_region
        // Predicated region
        $region17: #{tpu_custom_call.1} parent=15 // pred_check
          %p90 = pneg %p39
        $region18: #{tpu_custom_call.1} parent=15 // pred_check_branch
          %92 = sbr.rel (%p90) target = $region20
        $region19: #{tpu_custom_call.1} parent=15 // pred_region
          %s93 = sld [smem:[#allocation3 + %s17]]
          %p94 = scmp.lt.s32.totalorder %s93, 63
          %s95 = scalar_select %p94, %s93, 63
          %s96 = scalar_lea.vmem %s1, %s95
          %s97 = sld [smem:[#allocation3 + %s17]]
        $region20: #{tpu_custom_call.1} parent=15 // pred_fallthru
          _
      $region16: #{tpu_custom_call.1} parent=5 // pred_fallthru
        _
      %p98 = scmp.le.s32.totalorder 1, %s17
      %p99 = scmp.lt.s32.totalorder %s17, 17
      %p100 = pnand %p98, %p99
      %p101 = pneg %p100
      // Predicated region
      $region21: #{tpu_custom_call.1} parent=5 // pred_check
        _
      $region22: #{tpu_custom_call.1} parent=5 // pred_check_branch
        %103 = sbr.rel (%p100) target = $region24
      $region23: #{tpu_custom_call.1} parent=5 // pred_region
        %s104 = ssub.s32 %s17, 1
        %s105 = sld [smem:[#allocation3 + %s22]]
        %p106 = scmp.lt.s32.totalorder %s105, 63
        %s107 = scalar_select %p106, %s105, 63
        %s108 = scalar_lea.vmem %s1, %s107
        %p109 = pneg %p45
        %p110 = pneg %p42
        %p111 = pneg %p71
        %p112 = pneg %p68
        %s113 = sand.u32 %s58, 1
        %s114 = scalar_lea.sflag [#allocation5], %s113
        %s115 = sand.u32 %s58, 1
        %s116 = scalar_lea.vmem [#allocation4], %s115
        %s117 = sld [smem:[#allocation3 + %s22]]
        %p118 = scmp.lt.s32.totalorder %s117, 63
        %s119 = scalar_select %p118, %s117, 63
        %s120 = scalar_lea.vmem %s1, %s119
        %s121 = sld [smem:[#allocation3 + %s22]]
        %v122 = vld [vmem:[%s120] sm:$0x1]
        %vm123 = vcmask 253952
        %124 = vst.msk [vmem:[%s116] sm:$0x1] %vm123, %v122
        %s125 = sand.u32 %s58, 1
        %s126 = scalar_lea.sflag [#allocation5], %s125
        %s127 = sand.u32 %s58, 1
        %s128 = scalar_lea.vmem [#allocation4], %s127
        // Predicated region
        $region25: #{tpu_custom_call.1} parent=23 // pred_check
          %p129 = pneg %p68
        $region26: #{tpu_custom_call.1} parent=23 // pred_check_branch
          %131 = sbr.rel (%p129) target = $region28
        $region27: #{tpu_custom_call.1} parent=23 // pred_region
          %s133 = ssub.s32 16, 16
          %134 = vsyncadd %s126, %s133
          %s135 = smul.addr %s22, 16
          %s136 = scalar_lea.hbm %s2, %s135
          %s138 = sshll.u32 %s128, 4
          %s139 = int_to_ptr.vmem [resolvable:$true] %s138
          %141 = dma.vmem_to_hbm [thread:$0]  %s139, 16, %s136, %s126
        $region28: #{tpu_custom_call.1} parent=23 // pred_fallthru
          _
      $region24: #{tpu_custom_call.1} parent=5 // pred_fallthru
        _
      %p142 = scmp.le.s32.totalorder 2, %s17
      // Predicated region
      $region29: #{tpu_custom_call.1} parent=5 // pred_check
        %p143 = pneg %p142
      $region30: #{tpu_custom_call.1} parent=5 // pred_check_branch
        %145 = sbr.rel (%p143) target = $region32
      $region31: #{tpu_custom_call.1} parent=5 // pred_region
        %s146 = ssub.s32 %s17, 2
        // Predicated region
        $region33: #{tpu_custom_call.1} parent=31 // pred_check
          %p147 = pneg %p74
        $region34: #{tpu_custom_call.1} parent=31 // pred_check_branch
          %149 = sbr.rel (%p147) target = $region36
        $region35: #{tpu_custom_call.1} parent=31 // pred_region
          %s150 = sand.u32 %s59, 1
          %s151 = scalar_lea.sflag [#allocation5], %s150
          %s152 = sand.u32 %s59, 1
          %s153 = scalar_lea.vmem [#allocation4], %s152
          %154 = dma.done %s151, 16
        $region36: #{tpu_custom_call.1} parent=31 // pred_fallthru
          _
      $region32: #{tpu_custom_call.1} parent=5 // pred_fallthru
        _
    $region6: #{tpu_custom_call.1} parent=1 // loop_footer
      %s21 = sadd.s32 1, %s17
    $region7: #{tpu_custom_call.1} parent=1 // loop_footer_branch
      %16 = sbr.rel target = $region3
    $region8: #{tpu_custom_call.1} parent=1 // loop_exit
      _
    %155 = vsyncpa [#allocation5], 1
    %s156 = scalar_lea.sflag [#allocation5], 1
    %157 = vsyncpa %s156, 1

</llo_original>
